<compile_context>
chip_gen: v6e
topology: v6e:2x2x1
jax: 0.10.0
libtpu: 0.0.40
codegen_flags: <defaults>
</compile_context>

<pallas_src>
import functools

import jax
import jax.numpy as jnp
from jax import lax
from jax.experimental import pallas as pl
from jax.experimental.pallas import tpu as pltpu

_LANES = 128
_MAX_BLOCK_ROWS = 4096  # 4096 x 128 x 4B = 2 MiB per input per grid step.


def _bce_kernel(pred_ref, target_ref, out_ref, *,
                block_rows, valid_rows_last, last_block):
    i = pl.program_id(0)

    @pl.when(i == 0)
    def _():
        out_ref[...] = jnp.zeros_like(out_ref)

    p = pred_ref[...]
    t = target_ref[...]
    if p.dtype != jnp.float32:
        p = p.astype(jnp.float32)
    if t.dtype != jnp.float32:
        t = t.astype(jnp.float32)

    # PyTorch BCELoss clamps each log term at -100 to avoid -inf.
    log_p = jnp.maximum(jnp.log(p), jnp.float32(-100.0))
    log_1mp = jnp.maximum(jnp.log1p(-p), jnp.float32(-100.0))
    # inner = t*log_p + (1-t)*log_1mp, accumulated positively; the final
    # negation and the /N happen once in the wrapper.
    inner = log_1mp + t * (log_p - log_1mp)

    def fold(x):
        # Partial fold into a full (8, 128) accumulator: pure VPU adds; the
        # cross-lane reduction is deferred to the wrapper.
        return x.reshape(block_rows // 8, 8, _LANES).sum(axis=0)

    if valid_rows_last == block_rows:
        # R divides evenly into blocks: every step is the unmasked fast path.
        out_ref[...] += fold(inner)
    else:
        # Fast path for every fully-valid block.
        @pl.when(i != last_block)
        def _():
            out_ref[...] += fold(inner)

        # Row mask only for the single final ragged block (rows beyond R hold
        # unspecified data; lane tail already contributes exactly 0 via the
        # wrapper-side pad with 1.0).
        @pl.when(i == last_block)
        def _():
            rows = lax.broadcasted_iota(jnp.int32, (block_rows, _LANES), 0)
            masked = jnp.where(rows < valid_rows_last, inner, jnp.float32(0.0))
            out_ref[...] += fold(masked)


def bce_loss(pred, target, *, max_block_rows=_MAX_BLOCK_ROWS):
    """Mean binary cross-entropy over all elements (matches nn.BCELoss())."""
    assert pred.shape == target.shape
    n = 1
    for d in pred.shape:
        n *= d

    pred_flat = pred.reshape(-1)
    target_flat = target.reshape(-1)
    if n % _LANES != 0:
        # Only for lane-unaligned element counts. pred = target = 1.0 gives a
        # per-element loss of exactly 0, so no lane masking is needed.
        pad = _LANES - n % _LANES
        pred_flat = jnp.pad(pred_flat, (0, pad), constant_values=1.0)
        target_flat = jnp.pad(target_flat, (0, pad), constant_values=1.0)
    r = pred_flat.shape[0] // _LANES
    pred2 = pred_flat.reshape(r, _LANES)
    target2 = target_flat.reshape(r, _LANES)

    # block_rows: multiple of 16 (bf16 sublane tile), capped at max_block_rows.
    block_rows = min(max_block_rows, ((r + 15) // 16) * 16)
    total_blocks = pl.cdiv(r, block_rows)
    last_block = total_blocks - 1
    valid_rows_last = r - last_block * block_rows

    kernel = functools.partial(
        _bce_kernel, block_rows=block_rows,
        valid_rows_last=valid_rows_last, last_block=last_block)

    bytes_in = (pred2.size * pred2.dtype.itemsize
                + target2.size * target2.dtype.itemsize)
    partial = pl.pallas_call(
        kernel,
        out_shape=jax.ShapeDtypeStruct((8, _LANES), jnp.float32),
        grid_spec=pltpu.PrefetchScalarGridSpec(
            num_scalar_prefetch=0,
            grid=(total_blocks,),
            in_specs=[
                pl.BlockSpec((block_rows, _LANES), lambda i: (i, 0)),
                pl.BlockSpec((block_rows, _LANES), lambda i: (i, 0)),
            ],
            out_specs=pl.BlockSpec((8, _LANES), lambda i: (0, 0)),
        ),
        compiler_params=pltpu.CompilerParams(
            dimension_semantics=("arbitrary",),
            vmem_limit_bytes=48 * 1024 * 1024),
        cost_estimate=pl.CostEstimate(
            flops=6 * n,
            transcendentals=2 * n,
            bytes_accessed=bytes_in + 8 * _LANES * 4),
    )(pred2, target2)

    # Tiny final cross-lane reduce, negation and mean in the wrapper.
    return -(partial.sum()) / jnp.float32(n)


def bce_loss_ref(pred, target):
    p = pred.astype(jnp.float32)
    t = target.astype(jnp.float32)
    log_p = jnp.maximum(jnp.log(p), -100.0)
    log_1mp = jnp.maximum(jnp.log1p(-p), -100.0)
    return jnp.mean(-(t * log_p + (1.0 - t) * log_1mp))


if __name__ == "__main__":
    key = jax.random.PRNGKey(0)
    k1, k2, k3, k4 = jax.random.split(key, 4)

    # Segmentation-style usage: (B, C, H, W).
    shape = (2, 4, 16, 16)
    pred = jax.nn.sigmoid(jax.random.normal(k1, shape, dtype=jnp.float32))
    target = (jax.random.uniform(k2, shape) > 0.5).astype(jnp.float32)

    out = jax.block_until_ready(bce_loss(pred, target))
    ref = bce_loss_ref(pred, target)
    assert jnp.allclose(out, ref, atol=1e-5, rtol=1e-5), (out, ref)

    # Lane-unaligned shape exercises the pad-with-1.0 + tail-row-mask path.
    shape2 = (2, 3, 7, 5)
    pred2 = jax.nn.sigmoid(jax.random.normal(k3, shape2, dtype=jnp.float32))
    target2 = (jax.random.uniform(k4, shape2) > 0.5).astype(jnp.float32)

    out2 = jax.block_until_ready(bce_loss(pred2, target2))
    ref2 = bce_loss_ref(pred2, target2)
    assert jnp.allclose(out2, ref2, atol=1e-5, rtol=1e-5), (out2, ref2)

    # bf16 inputs: halved HBM traffic, compute still in f32 inside the kernel.
    pred3 = pred.astype(jnp.bfloat16)
    target3 = target.astype(jnp.bfloat16)
    out3 = jax.block_until_ready(bce_loss(pred3, target3))
    ref3 = bce_loss_ref(pred3, target3)
    assert jnp.allclose(out3, ref3, atol=1e-4, rtol=1e-4), (out3, ref3)

    print("KERNEL_OK")
</pallas_src>

<mosaic_0001>
module attributes {stable_mosaic.version = 11 : i64} {
  func.func @_bce_kernel(%arg0: i32, %arg1: memref<16x128xf32, #tpu.memory_space<vmem>>, %arg2: memref<16x128xf32, #tpu.memory_space<vmem>>, %arg3: memref<8x128xf32, #tpu.memory_space<vmem>>) attributes {dimension_semantics = [#tpu.dimension_semantics<arbitrary>], iteration_bounds = array<i64: 1>, scalar_prefetch = 0 : i64, scratch_operands = 0 : i64, tpu.core_type = #tpu.core_type<tc>, window_params = [{transform_indices = @transform_0, window_bounds = array<i64: 16, 128>}, {transform_indices = @transform_1, window_bounds = array<i64: 16, 128>}, {pipeline_mode = #tpu.pipeline_mode<synchronous>, transform_indices = @transform_2, window_bounds = array<i64: 8, 128>}]} {
    %c0_i32 = arith.constant 0 : i32
    %0 = arith.cmpi eq, %arg0, %c0_i32 : i32
    %1 = arith.extui %0 : i1 to i32
    %c0_i32_0 = arith.constant 0 : i32
    %2 = arith.cmpi ne, %1, %c0_i32_0 : i32
    scf.if %2 {
      %cst_11 = arith.constant 0.000000e+00 : f32
      %21 = vector.broadcast %cst_11 : f32 to vector<8x128xf32>
      %c0_12 = arith.constant 0 : index
      %c0_13 = arith.constant 0 : index
      %22 = vector.load %arg3[%c0_12, %c0_13] : memref<8x128xf32, #tpu.memory_space<vmem>>, vector<8x128xf32>
      tpu.vector_store %arg3[%c0_12, %c0_13], %21 {strides = array<i32>} : memref<8x128xf32, #tpu.memory_space<vmem>>, vector<8x128xf32>,
    } else {
    }
    %c0 = arith.constant 0 : index
    %c0_1 = arith.constant 0 : index
    %3 = vector.load %arg1[%c0, %c0_1] : memref<16x128xf32, #tpu.memory_space<vmem>>, vector<16x128xf32>
    %c0_2 = arith.constant 0 : index
    %c0_3 = arith.constant 0 : index
    %4 = vector.load %arg2[%c0_2, %c0_3] : memref<16x128xf32, #tpu.memory_space<vmem>>, vector<16x128xf32>
    %5 = math.log %3 : vector<16x128xf32>
    %cst = arith.constant -1.000000e+02 : f32
    %6 = vector.broadcast %cst : f32 to vector<16x128xf32>
    %7 = arith.maximumf %5, %6 : vector<16x128xf32>
    %cst_4 = arith.constant 0.000000e+00 : f32
    %8 = vector.broadcast %cst_4 : f32 to vector<16x128xf32>
    %9 = arith.subf %8, %3 : vector<16x128xf32>
    %10 = math.log1p %9 : vector<16x128xf32>
    %cst_5 = arith.constant -1.000000e+02 : f32
    %11 = vector.broadcast %cst_5 : f32 to vector<16x128xf32>
    %12 = arith.maximumf %10, %11 : vector<16x128xf32>
    %13 = arith.subf %7, %12 : vector<16x128xf32>
    %14 = arith.mulf %4, %13 : vector<16x128xf32>
    %15 = arith.addf %12, %14 : vector<16x128xf32>
    %c0_6 = arith.constant 0 : index
    %c0_7 = arith.constant 0 : index
    %16 = vector.load %arg3[%c0_6, %c0_7] : memref<8x128xf32, #tpu.memory_space<vmem>>, vector<8x128xf32>
    %17 = vector.shape_cast %15 : vector<16x128xf32> to vector<2x8x128xf32>
    %cst_8 = arith.constant dense<0.000000e+00> : vector<8x128xf32>
    %18 = vector.multi_reduction <add>, %17, %cst_8 [0] : vector<2x8x128xf32> to vector<8x128xf32>
    %19 = arith.addf %16, %18 : vector<8x128xf32>
    %c0_9 = arith.constant 0 : index
    %c0_10 = arith.constant 0 : index
    %20 = vector.load %arg3[%c0_9, %c0_10] : memref<8x128xf32, #tpu.memory_space<vmem>>, vector<8x128xf32>
    tpu.vector_store %arg3[%c0_9, %c0_10], %19 {strides = array<i32>} : memref<8x128xf32, #tpu.memory_space<vmem>>, vector<8x128xf32>,
    return
  }
  func.func @transform_0(%arg0: i32) -> (i32, i32) {
    %c0_i32 = arith.constant 0 : i32
    %c0_i32_0 = arith.constant 0 : i32
    return %arg0, %c0_i32 : i32, i32
  }
  func.func @transform_1(%arg0: i32) -> (i32, i32) {
    %c0_i32 = arith.constant 0 : i32
    %c0_i32_0 = arith.constant 0 : i32
    return %arg0, %c0_i32 : i32, i32
  }
  func.func @transform_2(%arg0: i32) -> (i32, i32) {
    %c0_i32 = arith.constant 0 : i32
    %c0_i32_0 = arith.constant 0 : i32
    %c0_i32_1 = arith.constant 0 : i32
    return %c0_i32, %c0_i32_0 : i32, i32
  }
}

</mosaic_0001>

<llo_original>
// kernel: tpu_custom_call.1
$region0: #{tpu_custom_call.1}
  #allocation0 [shape = 'u32[]', space=smem, size = 0x4, offset = 0x4, fixed_abs, tag = 'smem constant byte address 0x4 - core index']
  #allocation1 [shape = 'u32[144,128]{1,0:T(1,128)}', space=vmem, size = 0x12000, scoped, tag = 'internal scratch']
  %s0 = inlined_call_operand.hbm [shape: f32[16,128], index: 0, kind: input, shape index: {}]
  %s1 = inlined_call_operand.hbm [shape: f32[16,128], index: 1, kind: input, shape index: {}]
  %s2 = inlined_call_operand.hbm [shape: f32[8,128], index: 2, kind: output, shape index: {}]
  %s3 = sld [smem:[#allocation0]]
  $region30: #{tpu_custom_call.1} parent=0
    _
  %s5 = ssub.s32 1, %s3
  %s6 = scalar_select 0, %s5, %s3
  $region1: #{tpu_custom_call.1} parent=0
    #allocation2 [shape = 'u8[8192]{0}', space=vmem, size = 0x2000, scoped, tag = 'input window, operand 0, single buffered']
    #allocation3 [shape = 's32[1]{0}', space=sflag, size = 0x4, scoped, tag = 'scoped memory for tpu_custom_call.1']
    #allocation4 [shape = 's32[1]{0}', space=sflag, size = 0x4, scoped, tag = 'scoped memory for tpu_custom_call.1']
    #allocation5 [shape = 'u8[8192]{0}', space=vmem, size = 0x2000, scoped, tag = 'input window, operand 1, single buffered']
    #allocation6 [shape = 's32[1]{0}', space=sflag, size = 0x4, scoped, tag = 'scoped memory for tpu_custom_call.1']
    #allocation7 [shape = 'u8[4096]{0}', space=vmem, size = 0x1000, scoped, tag = 'output window, operand 0, single buffered']
    %7 = vsyncpa [#allocation3], 0
    %8 = vsyncpa [#allocation6], 0
    %9 = vsyncpa [#allocation4], 0
    // Predicated region
    $region2: #{tpu_custom_call.1} parent=1 // pred_check
      _
    $region3: #{tpu_custom_call.1} parent=1 // pred_check_branch
      %11 = sbr.rel (0) target = $region5
    $region4: #{tpu_custom_call.1} parent=1 // pred_region
      %s13 = ssub.s32 256, 256
      %14 = vsyncadd [#allocation3], %s13
      %s15 = sshll.u32 [#allocation2], 4
      %s16 = int_to_ptr.vmem [resolvable:$true] %s15
      %21 = dma.hbm_to_vmem [thread:$0]  %s0, 256, %s16, [#allocation3], 128, 128, 8
    $region5: #{tpu_custom_call.1} parent=1 // pred_fallthru
      _
    // Predicated region
    $region6: #{tpu_custom_call.1} parent=1 // pred_check
      _
    $region7: #{tpu_custom_call.1} parent=1 // pred_check_branch
      %23 = sbr.rel (0) target = $region9
    $region8: #{tpu_custom_call.1} parent=1 // pred_region
      %s25 = ssub.s32 256, 256
      %26 = vsyncadd [#allocation6], %s25
      %s27 = sshll.u32 [#allocation5], 4
      %s28 = int_to_ptr.vmem [resolvable:$true] %s27
      %33 = dma.hbm_to_vmem [thread:$0]  %s1, 256, %s28, [#allocation6], 128, 128, 8
    $region9: #{tpu_custom_call.1} parent=1 // pred_fallthru
      _
    // Predicated region
    $region10: #{tpu_custom_call.1} parent=1 // pred_check
      _
    $region11: #{tpu_custom_call.1} parent=1 // pred_check_branch
      %35 = sbr.rel (0) target = $region13
    $region12: #{tpu_custom_call.1} parent=1 // pred_region
      %36 = dma.done [#allocation3], 256
    $region13: #{tpu_custom_call.1} parent=1 // pred_fallthru
      _
    // Predicated region
    $region14: #{tpu_custom_call.1} parent=1 // pred_check
      _
    $region15: #{tpu_custom_call.1} parent=1 // pred_check_branch
      %38 = sbr.rel (0) target = $region17
    $region16: #{tpu_custom_call.1} parent=1 // pred_region
      %39 = dma.done [#allocation6], 256
    $region17: #{tpu_custom_call.1} parent=1 // pred_fallthru
      _
    %p40 = scmp.eq.s32.totalorder 0, 0
    // Predicated region
    $region18: #{tpu_custom_call.1} parent=1 // pred_check
      %p41 = pneg %p40
    $region19: #{tpu_custom_call.1} parent=1 // pred_check_branch
      %43 = sbr.rel (%p41) target = $region21
    $region20: #{tpu_custom_call.1} parent=1 // pred_region
      %44 = vst [vmem:[#allocation7] sm:$0xff] 0.0
    $region21: #{tpu_custom_call.1} parent=1 // pred_fallthru
      _
    %v45 = vld [vmem:[#allocation2] sm:$0xff]
    %v46 = vld [vmem:[#allocation2 + $0x8] sm:$0xff]
    %v47 = vld [vmem:[#allocation5] sm:$0xff]
    %v48 = vld [vmem:[#allocation5 + $0x8] sm:$0xff]
    %v49 = vlog2.pop %v45
    %v50 = vmul.f32 %v49, 0.6931472
    %v51 = vlog2.pop %v46
    %v52 = vmul.f32 %v51, 0.6931472
    %v53 = vmax.f32 %v50, -100.0
    %v54 = vmax.f32 %v52, -100.0
    %v55 = vsub.f32 0.0, %v45
    %v56 = vsub.f32 0.0, %v46
    %v57 = vadd.f32 %v55, 1.0
    %v58 = vlog2.pop %v57
    %v59 = vmul.f32 %v58, 0.6931472
    %v60 = vmul.f32 -0.5, %v55
    %v61 = vadd.f32 %v60, 1.0
    %v62 = vmul.f32 %v61, %v55
    %v63 = vand.u32 2147483647, %v55
    %vm64 = vcmp.lt.f32.partialorder %v63, 0.0004427343
    %v65 = vsel %vm64, %v62, %v59
    %v66 = vadd.f32 %v56, 1.0
    %v67 = vlog2.pop %v66
    %v68 = vmul.f32 %v67, 0.6931472
    %v69 = vmul.f32 -0.5, %v56
    %v70 = vadd.f32 %v69, 1.0
    %v71 = vmul.f32 %v70, %v56
    %v72 = vand.u32 2147483647, %v56
    %vm73 = vcmp.lt.f32.partialorder %v72, 0.0004427343
    %v74 = vsel %vm73, %v71, %v68
    %v75 = vmax.f32 %v65, -100.0
    %v76 = vmax.f32 %v74, -100.0
    %v77 = vsub.f32 %v53, %v75
    %v78 = vsub.f32 %v54, %v76
    %v79 = vmul.f32 %v47, %v77
    %v80 = vmul.f32 %v48, %v78
    %v81 = vadd.f32 %v75, %v79
    %v82 = vadd.f32 %v76, %v80
    %v83 = vld [vmem:[#allocation7] sm:$0xff]
    %v84 = vadd.f32 %v81, %v82
    %v85 = vadd.f32 %v83, %v84
    %86 = vst [vmem:[#allocation7] sm:$0xff] %v85
    // Predicated region
    $region22: #{tpu_custom_call.1} parent=1 // pred_check
      _
    $region23: #{tpu_custom_call.1} parent=1 // pred_check_branch
      %88 = sbr.rel (0) target = $region25
    $region24: #{tpu_custom_call.1} parent=1 // pred_region
      %s90 = ssub.s32 128, 128
      %91 = vsyncadd [#allocation4], %s90
      %s93 = sshll.u32 [#allocation7], 4
      %s94 = int_to_ptr.vmem [resolvable:$true] %s93
      %96 = dma.vmem_to_hbm [thread:$0]  %s94, 128, %s2, [#allocation4]
    $region25: #{tpu_custom_call.1} parent=1 // pred_fallthru
      _
    // Predicated region
    $region26: #{tpu_custom_call.1} parent=1 // pred_check
      _
    $region27: #{tpu_custom_call.1} parent=1 // pred_check_branch
      %98 = sbr.rel (0) target = $region29
    $region28: #{tpu_custom_call.1} parent=1 // pred_region
      %99 = dma.done [#allocation4], 128
    $region29: #{tpu_custom_call.1} parent=1 // pred_fallthru
      _
    %100 = vsyncpa [#allocation3], 1
    %101 = vsyncpa [#allocation6], 1
    %102 = vsyncpa [#allocation4], 1

</llo_original>
